<compile_context>
chip_gen: v5e
topology: v5e:2x2
jax: 0.10.0
libtpu: 0.0.40
codegen_flags: <defaults>
</compile_context>

<pallas_src>
import math

import jax
import jax.numpy as jnp
from jax.experimental import pallas as pl
from jax.experimental.pallas import tpu as pltpu

VOCAB = 1400        # nn.Embedding(1400, 64)
HID = 64            # hidden width of fc1/fc2
SLAB_ROWS = HID + 8  # 64 w2 rows + one aligned 8-row tail (b2, w3t, b3, pad)


def _critic_kernel(ids_ref, table1_hbm, slab_ref, out_ref, x_scratch, copy_sems):
    """ids_ref: SMEM (B,) int32.  table1_hbm: HBM (1400, 64) = emb @ W1 + b1.
    slab_ref: VMEM (72, 64) packed {w2, b2, w3t, b3}.  Gathers the B needed
    rows of the folded table straight from HBM into VMEM scratch, then runs
    relu -> fc2 -> relu -> value head entirely on-chip."""
    B = x_scratch.shape[0]

    # --- Row gather from HBM: issue all B row DMAs back-to-back, wait last. --
    # All ids_ref[i] scalar reads happen before the first .wait() so the SMEM
    # store->load forwarding is not broken (per review).
    copies = []
    for i in range(B):                                  # B is static & tiny
        idx = ids_ref[i]
        cp = pltpu.make_async_copy(
            table1_hbm.at[pl.ds(idx, 1), :],            # (1, 64) folded row
            x_scratch.at[pl.ds(i, 1), :],
            copy_sems.at[i])
        cp.start()
        copies.append(cp)
    for cp in copies:
        cp.wait()

    # --- Unpack the single packed weight slab (static slices). ---------------
    w2 = slab_ref[0:HID, :]                             # (64, 64)
    tail = slab_ref[HID:HID + 8, :]                     # (8, 64) aligned tile
    b2 = tail[0:1, :]                                   # (1, 64)
    w3t = tail[1:2, :]                                  # (1, 64)
    b3 = tail[2:3, 0:1]                                 # (1, 1) scalar bias

    # --- relu(fc1) -> fc2 -> relu -> value head. -----------------------------
    h1 = jnp.maximum(x_scratch[...], 0.0)               # relu(fc1(emb))  (B, 64)
    h2 = jnp.maximum(
        jnp.dot(h1, w2, preferred_element_type=jnp.float32) + b2, 0.0)  # (B, 64)
    # Value head (64 -> 1): VPU multiply + XLU lane reduce, no N=1 MXU pass.
    out_ref[...] = jnp.sum(h2 * w3t, axis=-1, keepdims=True) + b3       # (B, 1)


def critic_forward(x, folded_params):
    """x: (B, F) float array; folded_params from fold_params(...)."""
    table1, slab = folded_params
    # x[:, 0].long(); clamp so an out-of-range id can't read arbitrary memory.
    ids = jnp.clip(x[:, 0].astype(jnp.int32), 0, VOCAB - 1)
    B = ids.shape[0]
    # Keep the batch a multiple of 8 (full f32 sublane tiles); pad with id 0.
    B_pad = max(8, ((B + 7) // 8) * 8)
    if B_pad != B:
        ids = jnp.pad(ids, (0, B_pad - B))

    vmem = pl.BlockSpec(memory_space=pltpu.MemorySpace.VMEM)
    smem = pl.BlockSpec(memory_space=pltpu.MemorySpace.SMEM)
    hbm = pl.BlockSpec(memory_space=pl.ANY)   # leave the 1400x64 table off-chip

    out = pl.pallas_call(
        _critic_kernel,
        out_shape=jax.ShapeDtypeStruct((B_pad, 1), jnp.float32),
        in_specs=[smem, hbm, vmem],
        out_specs=vmem,
        scratch_shapes=[pltpu.VMEM((B_pad, HID), jnp.float32),
                        pltpu.SemaphoreType.DMA((B_pad,))],
    )(ids, table1, slab)
    return out[:B]


def init_params(key):
    """Deterministic parameter init mirroring PyTorch defaults in shape/scale."""
    k_emb, k1a, k1b, k2a, k2b, k3a, k3b = jax.random.split(key, 7)
    # nn.Embedding(1400, 64): N(0, 1)
    emb = jax.random.normal(k_emb, (VOCAB, HID), jnp.float32)
    # nn.Linear(in, out): U(-1/sqrt(in), 1/sqrt(in)); stored as (in, out).
    def linear(ka, kb, fan_in, fan_out):
        bound = 1.0 / math.sqrt(fan_in)
        w = jax.random.uniform(ka, (fan_in, fan_out), jnp.float32, -bound, bound)
        b = jax.random.uniform(kb, (1, fan_out), jnp.float32, -bound, bound)
        return w, b
    w1, b1 = linear(k1a, k1b, HID, HID)    # fc1
    w2, b2 = linear(k2a, k2b, HID, HID)    # fc2
    w3, b3 = linear(k3a, k3b, HID, 1)      # state_value
    return emb, w1, b1, w2, b2, w3, b3


def fold_params(params):
    """One-time prep: fold fc1 into the embedding table and pack the rest of
    the weights (w2, b2, w3^T, b3) into a single VMEM slab."""
    emb, w1, b1, w2, b2, w3, b3 = params
    table1 = (emb @ w1 + b1).astype(jnp.float32)    # (1400, 64): fc1 folded in
    slab = jnp.zeros((SLAB_ROWS, HID), jnp.float32)
    slab = slab.at[0:HID, :].set(w2)                # rows 0..63: w2
    slab = slab.at[HID, :].set(b2.reshape(-1))      # row 64: b2
    slab = slab.at[HID + 1, :].set(w3.reshape(-1))  # row 65: w3^T (64,) row
    slab = slab.at[HID + 2, :].set(b3.reshape(())[()])  # row 66: b3 broadcast
    return table1, slab


def reference_forward(x, params):
    """Pure-JAX reference of the PyTorch forward (for self-check)."""
    emb, w1, b1, w2, b2, w3, b3 = params
    ids = x[:, 0].astype(jnp.int32)
    e = emb[ids]
    h1 = jnp.maximum(e @ w1 + b1, 0.0)
    h2 = jnp.maximum(h1 @ w2 + b2, 0.0)
    return h2 @ w3 + b3


if __name__ == "__main__":
    key = jax.random.PRNGKey(0)
    k_params, k_ids, k_rest = jax.random.split(key, 3)

    params = init_params(k_params)
    folded = fold_params(params)      # host-side, once (not per forward call)

    # Small input consistent with the forward: (B, F), only column 0 is used
    # and must hold integer indices into the 1400-entry position embedding.
    B, F = 8, 4
    ids = jax.random.randint(k_ids, (B,), 0, VOCAB).astype(jnp.float32)
    rest = jax.random.normal(k_rest, (B, F - 1), jnp.float32)
    x = jnp.concatenate([ids[:, None], rest], axis=1)   # (8, 4)

    out = critic_forward(x, folded)
    out = jax.block_until_ready(out)

    ref = reference_forward(x, params)
    assert out.shape == (B, 1)
    assert jnp.allclose(out, ref, atol=1e-4, rtol=1e-4), (out, ref)

    print("KERNEL_OK")
</pallas_src>

<mosaic_0001>
module attributes {stable_mosaic.version = 11 : i64} {
  func.func @_critic_kernel(%arg0: memref<8xi32, #tpu.memory_space<smem>>, %arg1: memref<1400x64xf32, #tpu.memory_space<any>>, %arg2: memref<72x64xf32, #tpu.memory_space<vmem>>, %arg3: memref<8x1xf32, #tpu.memory_space<vmem>>, %arg4: memref<8x64xf32, #tpu.memory_space<vmem>>, %arg5: memref<8x!tpu.dma_semaphore, #tpu.memory_space<semaphore_mem>>) attributes {dimension_semantics = [], scalar_prefetch = 0 : i64, scratch_operands = 2 : i64, tpu.core_type = #tpu.core_type<tc>} {
    %c0 = arith.constant 0 : index
    %0 = memref.load %arg0[%c0] : memref<8xi32, #tpu.memory_space<smem>>
    %c0_i32 = arith.constant 0 : i32
    %c0_i32_0 = arith.constant 0 : i32
    %1 = tpu.memref_slice %arg1[%0, %c0_i32_0] : memref<1400x64xf32, #tpu.memory_space<any>> -> memref<1x64xf32, #tpu.memory_space<any>>
    %c0_i32_1 = arith.constant 0 : i32
    %c0_i32_2 = arith.constant 0 : i32
    %2 = tpu.memref_slice %arg4[%c0_i32_1, %c0_i32_2] : memref<8x64xf32, #tpu.memory_space<vmem>> -> memref<1x64xf32, #tpu.memory_space<vmem>>
    %3 = tpu.memref_slice %arg5[%c0_i32] : memref<8x!tpu.dma_semaphore, #tpu.memory_space<semaphore_mem>> -> memref<1x!tpu.dma_semaphore, #tpu.memory_space<semaphore_mem>>
    %4 = tpu.memref_squeeze %3 : memref<1x!tpu.dma_semaphore, #tpu.memory_space<semaphore_mem>> -> memref<!tpu.dma_semaphore, #tpu.memory_space<semaphore_mem>>
    tpu.enqueue_dma source(%1 : memref<1x64xf32, #tpu.memory_space<any>>) target(%2 : memref<1x64xf32, #tpu.memory_space<vmem>>) target_semaphore(%4 : memref<!tpu.dma_semaphore, #tpu.memory_space<semaphore_mem>>)
    %c1 = arith.constant 1 : index
    %5 = memref.load %arg0[%c1] : memref<8xi32, #tpu.memory_space<smem>>
    %c1_i32 = arith.constant 1 : i32
    %c0_i32_3 = arith.constant 0 : i32
    %6 = tpu.memref_slice %arg1[%5, %c0_i32_3] : memref<1400x64xf32, #tpu.memory_space<any>> -> memref<1x64xf32, #tpu.memory_space<any>>
    %c1_i32_4 = arith.constant 1 : i32
    %c0_i32_5 = arith.constant 0 : i32
    %7 = tpu.memref_slice %arg4[%c1_i32_4, %c0_i32_5] : memref<8x64xf32, #tpu.memory_space<vmem>> -> memref<1x64xf32, #tpu.memory_space<vmem>>
    %8 = tpu.memref_slice %arg5[%c1_i32] : memref<8x!tpu.dma_semaphore, #tpu.memory_space<semaphore_mem>> -> memref<1x!tpu.dma_semaphore, #tpu.memory_space<semaphore_mem>>
    %9 = tpu.memref_squeeze %8 : memref<1x!tpu.dma_semaphore, #tpu.memory_space<semaphore_mem>> -> memref<!tpu.dma_semaphore, #tpu.memory_space<semaphore_mem>>
    tpu.enqueue_dma source(%6 : memref<1x64xf32, #tpu.memory_space<any>>) target(%7 : memref<1x64xf32, #tpu.memory_space<vmem>>) target_semaphore(%9 : memref<!tpu.dma_semaphore, #tpu.memory_space<semaphore_mem>>)
    %c2 = arith.constant 2 : index
    %10 = memref.load %arg0[%c2] : memref<8xi32, #tpu.memory_space<smem>>
    %c2_i32 = arith.constant 2 : i32
    %c0_i32_6 = arith.constant 0 : i32
    %11 = tpu.memref_slice %arg1[%10, %c0_i32_6] : memref<1400x64xf32, #tpu.memory_space<any>> -> memref<1x64xf32, #tpu.memory_space<any>>
    %c2_i32_7 = arith.constant 2 : i32
    %c0_i32_8 = arith.constant 0 : i32
    %12 = tpu.memref_slice %arg4[%c2_i32_7, %c0_i32_8] : memref<8x64xf32, #tpu.memory_space<vmem>> -> memref<1x64xf32, #tpu.memory_space<vmem>>
    %13 = tpu.memref_slice %arg5[%c2_i32] : memref<8x!tpu.dma_semaphore, #tpu.memory_space<semaphore_mem>> -> memref<1x!tpu.dma_semaphore, #tpu.memory_space<semaphore_mem>>
    %14 = tpu.memref_squeeze %13 : memref<1x!tpu.dma_semaphore, #tpu.memory_space<semaphore_mem>> -> memref<!tpu.dma_semaphore, #tpu.memory_space<semaphore_mem>>
    tpu.enqueue_dma source(%11 : memref<1x64xf32, #tpu.memory_space<any>>) target(%12 : memref<1x64xf32, #tpu.memory_space<vmem>>) target_semaphore(%14 : memref<!tpu.dma_semaphore, #tpu.memory_space<semaphore_mem>>)
    %c3 = arith.constant 3 : index
    %15 = memref.load %arg0[%c3] : memref<8xi32, #tpu.memory_space<smem>>
    %c3_i32 = arith.constant 3 : i32
    %c0_i32_9 = arith.constant 0 : i32
    %16 = tpu.memref_slice %arg1[%15, %c0_i32_9] : memref<1400x64xf32, #tpu.memory_space<any>> -> memref<1x64xf32, #tpu.memory_space<any>>
    %c3_i32_10 = arith.constant 3 : i32
    %c0_i32_11 = arith.constant 0 : i32
    %17 = tpu.memref_slice %arg4[%c3_i32_10, %c0_i32_11] : memref<8x64xf32, #tpu.memory_space<vmem>> -> memref<1x64xf32, #tpu.memory_space<vmem>>
    %18 = tpu.memref_slice %arg5[%c3_i32] : memref<8x!tpu.dma_semaphore, #tpu.memory_space<semaphore_mem>> -> memref<1x!tpu.dma_semaphore, #tpu.memory_space<semaphore_mem>>
    %19 = tpu.memref_squeeze %18 : memref<1x!tpu.dma_semaphore, #tpu.memory_space<semaphore_mem>> -> memref<!tpu.dma_semaphore, #tpu.memory_space<semaphore_mem>>
    tpu.enqueue_dma source(%16 : memref<1x64xf32, #tpu.memory_space<any>>) target(%17 : memref<1x64xf32, #tpu.memory_space<vmem>>) target_semaphore(%19 : memref<!tpu.dma_semaphore, #tpu.memory_space<semaphore_mem>>)
    %c4 = arith.constant 4 : index
    %20 = memref.load %arg0[%c4] : memref<8xi32, #tpu.memory_space<smem>>
    %c4_i32 = arith.constant 4 : i32
    %c0_i32_12 = arith.constant 0 : i32
    %21 = tpu.memref_slice %arg1[%20, %c0_i32_12] : memref<1400x64xf32, #tpu.memory_space<any>> -> memref<1x64xf32, #tpu.memory_space<any>>
    %c4_i32_13 = arith.constant 4 : i32
    %c0_i32_14 = arith.constant 0 : i32
    %22 = tpu.memref_slice %arg4[%c4_i32_13, %c0_i32_14] : memref<8x64xf32, #tpu.memory_space<vmem>> -> memref<1x64xf32, #tpu.memory_space<vmem>>
    %23 = tpu.memref_slice %arg5[%c4_i32] : memref<8x!tpu.dma_semaphore, #tpu.memory_space<semaphore_mem>> -> memref<1x!tpu.dma_semaphore, #tpu.memory_space<semaphore_mem>>
    %24 = tpu.memref_squeeze %23 : memref<1x!tpu.dma_semaphore, #tpu.memory_space<semaphore_mem>> -> memref<!tpu.dma_semaphore, #tpu.memory_space<semaphore_mem>>
    tpu.enqueue_dma source(%21 : memref<1x64xf32, #tpu.memory_space<any>>) target(%22 : memref<1x64xf32, #tpu.memory_space<vmem>>) target_semaphore(%24 : memref<!tpu.dma_semaphore, #tpu.memory_space<semaphore_mem>>)
    %c5 = arith.constant 5 : index
    %25 = memref.load %arg0[%c5] : memref<8xi32, #tpu.memory_space<smem>>
    %c5_i32 = arith.constant 5 : i32
    %c0_i32_15 = arith.constant 0 : i32
    %26 = tpu.memref_slice %arg1[%25, %c0_i32_15] : memref<1400x64xf32, #tpu.memory_space<any>> -> memref<1x64xf32, #tpu.memory_space<any>>
    %c5_i32_16 = arith.constant 5 : i32
    %c0_i32_17 = arith.constant 0 : i32
    %27 = tpu.memref_slice %arg4[%c5_i32_16, %c0_i32_17] : memref<8x64xf32, #tpu.memory_space<vmem>> -> memref<1x64xf32, #tpu.memory_space<vmem>>
    %28 = tpu.memref_slice %arg5[%c5_i32] : memref<8x!tpu.dma_semaphore, #tpu.memory_space<semaphore_mem>> -> memref<1x!tpu.dma_semaphore, #tpu.memory_space<semaphore_mem>>
    %29 = tpu.memref_squeeze %28 : memref<1x!tpu.dma_semaphore, #tpu.memory_space<semaphore_mem>> -> memref<!tpu.dma_semaphore, #tpu.memory_space<semaphore_mem>>
    tpu.enqueue_dma source(%26 : memref<1x64xf32, #tpu.memory_space<any>>) target(%27 : memref<1x64xf32, #tpu.memory_space<vmem>>) target_semaphore(%29 : memref<!tpu.dma_semaphore, #tpu.memory_space<semaphore_mem>>)
    %c6 = arith.constant 6 : index
    %30 = memref.load %arg0[%c6] : memref<8xi32, #tpu.memory_space<smem>>
    %c6_i32 = arith.constant 6 : i32
    %c0_i32_18 = arith.constant 0 : i32
    %31 = tpu.memref_slice %arg1[%30, %c0_i32_18] : memref<1400x64xf32, #tpu.memory_space<any>> -> memref<1x64xf32, #tpu.memory_space<any>>
    %c6_i32_19 = arith.constant 6 : i32
    %c0_i32_20 = arith.constant 0 : i32
    %32 = tpu.memref_slice %arg4[%c6_i32_19, %c0_i32_20] : memref<8x64xf32, #tpu.memory_space<vmem>> -> memref<1x64xf32, #tpu.memory_space<vmem>>
    %33 = tpu.memref_slice %arg5[%c6_i32] : memref<8x!tpu.dma_semaphore, #tpu.memory_space<semaphore_mem>> -> memref<1x!tpu.dma_semaphore, #tpu.memory_space<semaphore_mem>>
    %34 = tpu.memref_squeeze %33 : memref<1x!tpu.dma_semaphore, #tpu.memory_space<semaphore_mem>> -> memref<!tpu.dma_semaphore, #tpu.memory_space<semaphore_mem>>
    tpu.enqueue_dma source(%31 : memref<1x64xf32, #tpu.memory_space<any>>) target(%32 : memref<1x64xf32, #tpu.memory_space<vmem>>) target_semaphore(%34 : memref<!tpu.dma_semaphore, #tpu.memory_space<semaphore_mem>>)
    %c7 = arith.constant 7 : index
    %35 = memref.load %arg0[%c7] : memref<8xi32, #tpu.memory_space<smem>>
    %c7_i32 = arith.constant 7 : i32
    %c0_i32_21 = arith.constant 0 : i32
    %36 = tpu.memref_slice %arg1[%35, %c0_i32_21] : memref<1400x64xf32, #tpu.memory_space<any>> -> memref<1x64xf32, #tpu.memory_space<any>>
    %c7_i32_22 = arith.constant 7 : i32
    %c0_i32_23 = arith.constant 0 : i32
    %37 = tpu.memref_slice %arg4[%c7_i32_22, %c0_i32_23] : memref<8x64xf32, #tpu.memory_space<vmem>> -> memref<1x64xf32, #tpu.memory_space<vmem>>
    %38 = tpu.memref_slice %arg5[%c7_i32] : memref<8x!tpu.dma_semaphore, #tpu.memory_space<semaphore_mem>> -> memref<1x!tpu.dma_semaphore, #tpu.memory_space<semaphore_mem>>
    %39 = tpu.memref_squeeze %38 : memref<1x!tpu.dma_semaphore, #tpu.memory_space<semaphore_mem>> -> memref<!tpu.dma_semaphore, #tpu.memory_space<semaphore_mem>>
    tpu.enqueue_dma source(%36 : memref<1x64xf32, #tpu.memory_space<any>>) target(%37 : memref<1x64xf32, #tpu.memory_space<vmem>>) target_semaphore(%39 : memref<!tpu.dma_semaphore, #tpu.memory_space<semaphore_mem>>)
    %c0_i32_24 = arith.constant 0 : i32
    %c0_i32_25 = arith.constant 0 : i32
    %40 = tpu.memref_slice %arg1[%0, %c0_i32_25] : memref<1400x64xf32, #tpu.memory_space<any>> -> memref<1x64xf32, #tpu.memory_space<any>>
    %c0_i32_26 = arith.constant 0 : i32
    %c0_i32_27 = arith.constant 0 : i32
    %41 = tpu.memref_slice %arg4[%c0_i32_26, %c0_i32_27] : memref<8x64xf32, #tpu.memory_space<vmem>> -> memref<1x64xf32, #tpu.memory_space<vmem>>
    %42 = tpu.memref_slice %arg5[%c0_i32_24] : memref<8x!tpu.dma_semaphore, #tpu.memory_space<semaphore_mem>> -> memref<1x!tpu.dma_semaphore, #tpu.memory_space<semaphore_mem>>
    %43 = tpu.memref_squeeze %42 : memref<1x!tpu.dma_semaphore, #tpu.memory_space<semaphore_mem>> -> memref<!tpu.dma_semaphore, #tpu.memory_space<semaphore_mem>>
    tpu.wait_dma2 semaphore(%43 : memref<!tpu.dma_semaphore, #tpu.memory_space<semaphore_mem>>) src(%40 : memref<1x64xf32, #tpu.memory_space<any>>) dst(%41 : memref<1x64xf32, #tpu.memory_space<vmem>>)
    %c1_i32_28 = arith.constant 1 : i32
    %c0_i32_29 = arith.constant 0 : i32
    %44 = tpu.memref_slice %arg1[%5, %c0_i32_29] : memref<1400x64xf32, #tpu.memory_space<any>> -> memref<1x64xf32, #tpu.memory_space<any>>
    %c1_i32_30 = arith.constant 1 : i32
    %c0_i32_31 = arith.constant 0 : i32
    %45 = tpu.memref_slice %arg4[%c1_i32_30, %c0_i32_31] : memref<8x64xf32, #tpu.memory_space<vmem>> -> memref<1x64xf32, #tpu.memory_space<vmem>>
    %46 = tpu.memref_slice %arg5[%c1_i32_28] : memref<8x!tpu.dma_semaphore, #tpu.memory_space<semaphore_mem>> -> memref<1x!tpu.dma_semaphore, #tpu.memory_space<semaphore_mem>>
    %47 = tpu.memref_squeeze %46 : memref<1x!tpu.dma_semaphore, #tpu.memory_space<semaphore_mem>> -> memref<!tpu.dma_semaphore, #tpu.memory_space<semaphore_mem>>
    tpu.wait_dma2 semaphore(%47 : memref<!tpu.dma_semaphore, #tpu.memory_space<semaphore_mem>>) src(%44 : memref<1x64xf32, #tpu.memory_space<any>>) dst(%45 : memref<1x64xf32, #tpu.memory_space<vmem>>)
    %c2_i32_32 = arith.constant 2 : i32
    %c0_i32_33 = arith.constant 0 : i32
    %48 = tpu.memref_slice %arg1[%10, %c0_i32_33] : memref<1400x64xf32, #tpu.memory_space<any>> -> memref<1x64xf32, #tpu.memory_space<any>>
    %c2_i32_34 = arith.constant 2 : i32
    %c0_i32_35 = arith.constant 0 : i32
    %49 = tpu.memref_slice %arg4[%c2_i32_34, %c0_i32_35] : memref<8x64xf32, #tpu.memory_space<vmem>> -> memref<1x64xf32, #tpu.memory_space<vmem>>
    %50 = tpu.memref_slice %arg5[%c2_i32_32] : memref<8x!tpu.dma_semaphore, #tpu.memory_space<semaphore_mem>> -> memref<1x!tpu.dma_semaphore, #tpu.memory_space<semaphore_mem>>
    %51 = tpu.memref_squeeze %50 : memref<1x!tpu.dma_semaphore, #tpu.memory_space<semaphore_mem>> -> memref<!tpu.dma_semaphore, #tpu.memory_space<semaphore_mem>>
    tpu.wait_dma2 semaphore(%51 : memref<!tpu.dma_semaphore, #tpu.memory_space<semaphore_mem>>) src(%48 : memref<1x64xf32, #tpu.memory_space<any>>) dst(%49 : memref<1x64xf32, #tpu.memory_space<vmem>>)
    %c3_i32_36 = arith.constant 3 : i32
    %c0_i32_37 = arith.constant 0 : i32
    %52 = tpu.memref_slice %arg1[%15, %c0_i32_37] : memref<1400x64xf32, #tpu.memory_space<any>> -> memref<1x64xf32, #tpu.memory_space<any>>
    %c3_i32_38 = arith.constant 3 : i32
    %c0_i32_39 = arith.constant 0 : i32
    %53 = tpu.memref_slice %arg4[%c3_i32_38, %c0_i32_39] : memref<8x64xf32, #tpu.memory_space<vmem>> -> memref<1x64xf32, #tpu.memory_space<vmem>>
    %54 = tpu.memref_slice %arg5[%c3_i32_36] : memref<8x!tpu.dma_semaphore, #tpu.memory_space<semaphore_mem>> -> memref<1x!tpu.dma_semaphore, #tpu.memory_space<semaphore_mem>>
    %55 = tpu.memref_squeeze %54 : memref<1x!tpu.dma_semaphore, #tpu.memory_space<semaphore_mem>> -> memref<!tpu.dma_semaphore, #tpu.memory_space<semaphore_mem>>
    tpu.wait_dma2 semaphore(%55 : memref<!tpu.dma_semaphore, #tpu.memory_space<semaphore_mem>>) src(%52 : memref<1x64xf32, #tpu.memory_space<any>>) dst(%53 : memref<1x64xf32, #tpu.memory_space<vmem>>)
    %c4_i32_40 = arith.constant 4 : i32
    %c0_i32_41 = arith.constant 0 : i32
    %56 = tpu.memref_slice %arg1[%20, %c0_i32_41] : memref<1400x64xf32, #tpu.memory_space<any>> -> memref<1x64xf32, #tpu.memory_space<any>>
    %c4_i32_42 = arith.constant 4 : i32
    %c0_i32_43 = arith.constant 0 : i32
    %57 = tpu.memref_slice %arg4[%c4_i32_42, %c0_i32_43] : memref<8x64xf32, #tpu.memory_space<vmem>> -> memref<1x64xf32, #tpu.memory_space<vmem>>
    %58 = tpu.memref_slice %arg5[%c4_i32_40] : memref<8x!tpu.dma_semaphore, #tpu.memory_space<semaphore_mem>> -> memref<1x!tpu.dma_semaphore, #tpu.memory_space<semaphore_mem>>
    %59 = tpu.memref_squeeze %58 : memref<1x!tpu.dma_semaphore, #tpu.memory_space<semaphore_mem>> -> memref<!tpu.dma_semaphore, #tpu.memory_space<semaphore_mem>>
    tpu.wait_dma2 semaphore(%59 : memref<!tpu.dma_semaphore, #tpu.memory_space<semaphore_mem>>) src(%56 : memref<1x64xf32, #tpu.memory_space<any>>) dst(%57 : memref<1x64xf32, #tpu.memory_space<vmem>>)
    %c5_i32_44 = arith.constant 5 : i32
    %c0_i32_45 = arith.constant 0 : i32
    %60 = tpu.memref_slice %arg1[%25, %c0_i32_45] : memref<1400x64xf32, #tpu.memory_space<any>> -> memref<1x64xf32, #tpu.memory_space<any>>
    %c5_i32_46 = arith.constant 5 : i32
    %c0_i32_47 = arith.constant 0 : i32
    %61 = tpu.memref_slice %arg4[%c5_i32_46, %c0_i32_47] : memref<8x64xf32, #tpu.memory_space<vmem>> -> memref<1x64xf32, #tpu.memory_space<vmem>>
    %62 = tpu.memref_slice %arg5[%c5_i32_44] : memref<8x!tpu.dma_semaphore, #tpu.memory_space<semaphore_mem>> -> memref<1x!tpu.dma_semaphore, #tpu.memory_space<semaphore_mem>>
    %63 = tpu.memref_squeeze %62 : memref<1x!tpu.dma_semaphore, #tpu.memory_space<semaphore_mem>> -> memref<!tpu.dma_semaphore, #tpu.memory_space<semaphore_mem>>
    tpu.wait_dma2 semaphore(%63 : memref<!tpu.dma_semaphore, #tpu.memory_space<semaphore_mem>>) src(%60 : memref<1x64xf32, #tpu.memory_space<any>>) dst(%61 : memref<1x64xf32, #tpu.memory_space<vmem>>)
    %c6_i32_48 = arith.constant 6 : i32
    %c0_i32_49 = arith.constant 0 : i32
    %64 = tpu.memref_slice %arg1[%30, %c0_i32_49] : memref<1400x64xf32, #tpu.memory_space<any>> -> memref<1x64xf32, #tpu.memory_space<any>>
    %c6_i32_50 = arith.constant 6 : i32
    %c0_i32_51 = arith.constant 0 : i32
    %65 = tpu.memref_slice %arg4[%c6_i32_50, %c0_i32_51] : memref<8x64xf32, #tpu.memory_space<vmem>> -> memref<1x64xf32, #tpu.memory_space<vmem>>
    %66 = tpu.memref_slice %arg5[%c6_i32_48] : memref<8x!tpu.dma_semaphore, #tpu.memory_space<semaphore_mem>> -> memref<1x!tpu.dma_semaphore, #tpu.memory_space<semaphore_mem>>
    %67 = tpu.memref_squeeze %66 : memref<1x!tpu.dma_semaphore, #tpu.memory_space<semaphore_mem>> -> memref<!tpu.dma_semaphore, #tpu.memory_space<semaphore_mem>>
    tpu.wait_dma2 semaphore(%67 : memref<!tpu.dma_semaphore, #tpu.memory_space<semaphore_mem>>) src(%64 : memref<1x64xf32, #tpu.memory_space<any>>) dst(%65 : memref<1x64xf32, #tpu.memory_space<vmem>>)
    %c7_i32_52 = arith.constant 7 : i32
    %c0_i32_53 = arith.constant 0 : i32
    %68 = tpu.memref_slice %arg1[%35, %c0_i32_53] : memref<1400x64xf32, #tpu.memory_space<any>> -> memref<1x64xf32, #tpu.memory_space<any>>
    %c7_i32_54 = arith.constant 7 : i32
    %c0_i32_55 = arith.constant 0 : i32
    %69 = tpu.memref_slice %arg4[%c7_i32_54, %c0_i32_55] : memref<8x64xf32, #tpu.memory_space<vmem>> -> memref<1x64xf32, #tpu.memory_space<vmem>>
    %70 = tpu.memref_slice %arg5[%c7_i32_52] : memref<8x!tpu.dma_semaphore, #tpu.memory_space<semaphore_mem>> -> memref<1x!tpu.dma_semaphore, #tpu.memory_space<semaphore_mem>>
    %71 = tpu.memref_squeeze %70 : memref<1x!tpu.dma_semaphore, #tpu.memory_space<semaphore_mem>> -> memref<!tpu.dma_semaphore, #tpu.memory_space<semaphore_mem>>
    tpu.wait_dma2 semaphore(%71 : memref<!tpu.dma_semaphore, #tpu.memory_space<semaphore_mem>>) src(%68 : memref<1x64xf32, #tpu.memory_space<any>>) dst(%69 : memref<1x64xf32, #tpu.memory_space<vmem>>)
    %c0_56 = arith.constant 0 : index
    %c0_57 = arith.constant 0 : index
    %72 = vector.load %arg2[%c0_56, %c0_57] : memref<72x64xf32, #tpu.memory_space<vmem>>, vector<64x64xf32>
    %c64 = arith.constant 64 : index
    %c0_58 = arith.constant 0 : index
    %73 = vector.load %arg2[%c64, %c0_58] : memref<72x64xf32, #tpu.memory_space<vmem>>, vector<8x64xf32>
    %74 = vector.extract_strided_slice %73 {offsets = [0, 0], sizes = [1, 64], strides = [1, 1]} : vector<8x64xf32> to vector<1x64xf32>
    %75 = vector.extract_strided_slice %73 {offsets = [1, 0], sizes = [1, 64], strides = [1, 1]} : vector<8x64xf32> to vector<1x64xf32>
    %76 = vector.extract_strided_slice %73 {offsets = [2, 0], sizes = [1, 1], strides = [1, 1]} : vector<8x64xf32> to vector<1x1xf32>
    %c0_59 = arith.constant 0 : index
    %c0_60 = arith.constant 0 : index
    %77 = vector.load %arg4[%c0_59, %c0_60] : memref<8x64xf32, #tpu.memory_space<vmem>>, vector<8x64xf32>
    %cst = arith.constant 0.000000e+00 : f32
    %78 = vector.broadcast %cst : f32 to vector<8x64xf32>
    %79 = arith.maximumf %77, %78 : vector<8x64xf32>
    %cst_61 = arith.constant dense<0.000000e+00> : vector<8x64xf32>
    %80 = tpu.matmul %79, %72, %cst_61 {dimension_numbers = #tpu.dot_dimension_numbers<[1], [0], [0], [1], [0, 0, 1, 1], [], []>} : vector<8x64xf32>, vector<64x64xf32>, vector<8x64xf32> -> vector<8x64xf32>
    %81 = vector.broadcast %74 : vector<1x64xf32> to vector<8x64xf32>
    %82 = arith.addf %80, %81 : vector<8x64xf32>
    %cst_62 = arith.constant 0.000000e+00 : f32
    %83 = vector.broadcast %cst_62 : f32 to vector<8x64xf32>
    %84 = arith.maximumf %82, %83 : vector<8x64xf32>
    %85 = vector.broadcast %75 : vector<1x64xf32> to vector<8x64xf32>
    %86 = arith.mulf %84, %85 : vector<8x64xf32>
    %cst_63 = arith.constant dense<0.000000e+00> : vector<8xf32>
    %87 = vector.multi_reduction <add>, %86, %cst_63 [1] : vector<8x64xf32> to vector<8xf32>
    %88 = vector.shape_cast %87 : vector<8xf32> to vector<8x1xf32>
    %89 = vector.broadcast %76 : vector<1x1xf32> to vector<8x1xf32>
    %90 = arith.addf %88, %89 : vector<8x1xf32>
    %c0_64 = arith.constant 0 : index
    %c0_65 = arith.constant 0 : index
    %91 = vector.load %arg3[%c0_64, %c0_65] : memref<8x1xf32, #tpu.memory_space<vmem>>, vector<8x1xf32>
    tpu.vector_store %arg3[%c0_64, %c0_65], %90 {strides = array<i32>} : memref<8x1xf32, #tpu.memory_space<vmem>>, vector<8x1xf32>,
    return
  }
}

</mosaic_0001>

<llo_original>
// kernel: tpu_custom_call.1
$region0: #{tpu_custom_call.1}
  #allocation0 [shape = 'u32[]', space=smem, size = 0x4, offset = 0x4, fixed_abs, tag = 'smem constant byte address 0x4 - core index']
  #allocation1 [shape = 'u32[72,128]{1,0:T(1,128)}', space=vmem, size = 0x9000, scoped, tag = 'internal scratch']
  #allocation2 [shape = 'f32[8,64]{1,0:T(8,128)}', space=vmem, size = 0x1000, scoped, tag = 'scratch operand']
  #allocation3 [shape = 's32[8]{0}', space=sflag, size = 0x20, scoped, tag = 'scratch operand']
  #allocation6 [shape = 's32[]', space=sflag, size = 0x4, offset = 0, fixed_abs, tag = 'sflag constant byte address 0x0 - dummy sync flag']
  #allocation7 [shape = 's32[]', space=sflag, size = 0x4, offset = 0, fixed_abs, tag = 'sflag constant byte address 0x0 - dummy sync flag']
  #allocation8 [shape = 's32[]', space=sflag, size = 0x4, offset = 0, fixed_abs, tag = 'sflag constant byte address 0x0 - dummy sync flag']
  #allocation9 [shape = 's32[]', space=sflag, size = 0x4, offset = 0, fixed_abs, tag = 'sflag constant byte address 0x0 - dummy sync flag']
  #allocation10 [shape = 's32[]', space=sflag, size = 0x4, offset = 0, fixed_abs, tag = 'sflag constant byte address 0x0 - dummy sync flag']
  #allocation11 [shape = 's32[]', space=sflag, size = 0x4, offset = 0, fixed_abs, tag = 'sflag constant byte address 0x0 - dummy sync flag']
  #allocation12 [shape = 's32[]', space=sflag, size = 0x4, offset = 0, fixed_abs, tag = 'sflag constant byte address 0x0 - dummy sync flag']
  #allocation13 [shape = 's32[]', space=sflag, size = 0x4, offset = 0, fixed_abs, tag = 'sflag constant byte address 0x0 - dummy sync flag']
  %s0 = inlined_call_operand.vmem [shape: s32[8], index: 0, kind: input, shape index: {}]
  %s1 = inlined_call_operand.vmem [shape: f32[1400,64], index: 1, kind: input, shape index: {}]
  %s2 = inlined_call_operand.vmem [shape: f32[72,64], index: 2, kind: input, shape index: {}]
  %s3 = inlined_call_operand.vmem [shape: f32[8,1], index: 3, kind: output, shape index: {}]
  %s4 = sld [smem:[#allocation0]]
  $region262: #{tpu_custom_call.1} parent=0
    _
  %s6 = ssub.s32 1, %s4
  %s7 = scalar_select 0, %s6, %s4
  $region1: #{tpu_custom_call.1} parent=0
    #allocation4 [shape = 'u8[512]{0}', space=smem, size = 0x200, scoped, tag = 'input window, operand 0, single buffered']
    #allocation5 [shape = 's32[1]{0}', space=sflag, size = 0x4, scoped, tag = 'scoped memory for tpu_custom_call.1']
    %8 = vsyncpa [#allocation5], 0
    // Predicated region
    $region2: #{tpu_custom_call.1} parent=1 // pred_check
      _
    $region3: #{tpu_custom_call.1} parent=1 // pred_check_branch
      %10 = sbr.rel (0) target = $region5
    $region4: #{tpu_custom_call.1} parent=1 // pred_region
      %12 = vsyncadd [#allocation5], 0
      %s14 = sshll.u32 %s0, 4
      %s15 = int_to_ptr.vmem [resolvable:$true] %s14
      %17 = dma.vmem_to_smem %s15, 16, [#allocation4], [#allocation5]
    $region5: #{tpu_custom_call.1} parent=1 // pred_fallthru
      _
    // Predicated region
    $region6: #{tpu_custom_call.1} parent=1 // pred_check
      _
    $region7: #{tpu_custom_call.1} parent=1 // pred_check_branch
      %19 = sbr.rel (0) target = $region9
    $region8: #{tpu_custom_call.1} parent=1 // pred_region
      _
    $region9: #{tpu_custom_call.1} parent=1 // pred_fallthru
      _
    // Predicated region
    $region10: #{tpu_custom_call.1} parent=1 // pred_check
      _
    $region11: #{tpu_custom_call.1} parent=1 // pred_check_branch
      %21 = sbr.rel (0) target = $region13
    $region12: #{tpu_custom_call.1} parent=1 // pred_region
      %23 = dma.done [#allocation5], 16
    $region13: #{tpu_custom_call.1} parent=1 // pred_fallthru
      _
    %24 = sfence
    %s25 = sld [smem:[#allocation4]]
    %s26 = scalar_lea.vmem %s1, %s25
    // Predicated region
    $region14: #{tpu_custom_call.1} parent=1 // pred_check
      _
    $region15: #{tpu_custom_call.1} parent=1 // pred_check_branch
      %28 = sbr.rel target = $region17
    $region16: #{tpu_custom_call.1} parent=1 // pred_region
      // Predicated region
      $region29: #{tpu_custom_call.1} parent=16 // pred_check
        _
      $region30: #{tpu_custom_call.1} parent=16 // pred_check_branch
        %44 = sbr.rel (0) target = $region32
      $region31: #{tpu_custom_call.1} parent=16 // pred_region
        %s46 = ssub.s32 2, 1
        loop: start=0, step=1, limit=1
        $region33: #{tpu_custom_call.1} parent=31 // loop_pre_header
          _
        $region34: #{tpu_custom_call.1} parent=31 // loop_header
          %s48 = sphi 0, %s52
          %p49 = scmp.ge.s32.totalorder %s48, 1
          %s53 = sphi %s26, %s26
          %s54 = sphi [#allocation2], [#allocation2]
        $region35: #{tpu_custom_call.1} parent=31 // loop_header_branch
          %51 = sbr.rel (%p49) target = $region39
        $region36: #{tpu_custom_call.1} parent=31 // loop_body
          %v55 = vld [vmem:[%s53] sm:%s46]
          %56 = vst [vmem:[%s54] sm:%s46] %v55
        $region37: #{tpu_custom_call.1} parent=31 // loop_footer
          %s52 = sadd.s32 1, %s48
        $region38: #{tpu_custom_call.1} parent=31 // loop_footer_branch
          %47 = sbr.rel target = $region34
        $region39: #{tpu_custom_call.1} parent=31 // loop_exit
          _
      $region32: #{tpu_custom_call.1} parent=16 // pred_fallthru
        _
    $region17: #{tpu_custom_call.1} parent=1 // pred_fallthru
      _
    // Predicated region
    $region18: #{tpu_custom_call.1} parent=1 // pred_check
      _
    $region19: #{tpu_custom_call.1} parent=1 // pred_check_branch
      %30 = sbr.rel (0) target = $region21
    $region20: #{tpu_custom_call.1} parent=1 // pred_region
      %s32 = ssub.s32 2, 1
      loop: start=0, step=1, limit=1
      $region22: #{tpu_custom_call.1} parent=20 // loop_pre_header
        _
      $region23: #{tpu_custom_call.1} parent=20 // loop_header
        %s34 = sphi 0, %s38
        %p35 = scmp.ge.s32.totalorder %s34, 1
        %s39 = sphi %s26, %s26
        %s40 = sphi [#allocation2], [#allocation2]
      $region24: #{tpu_custom_call.1} parent=20 // loop_header_branch
        %37 = sbr.rel (%p35) target = $region28
      $region25: #{tpu_custom_call.1} parent=20 // loop_body
        %v41 = vld [vmem:[%s39] sm:%s32]
        %42 = vst [vmem:[%s40] sm:%s32] %v41
      $region26: #{tpu_custom_call.1} parent=20 // loop_footer
        %s38 = sadd.s32 1, %s34
      $region27: #{tpu_custom_call.1} parent=20 // loop_footer_branch
        %33 = sbr.rel target = $region23
      $region28: #{tpu_custom_call.1} parent=20 // loop_exit
        _
    $region21: #{tpu_custom_call.1} parent=1 // pred_fallthru
      _
    // Predicated region
    $region40: #{tpu_custom_call.1} parent=1 // pred_check
      _
    $region41: #{tpu_custom_call.1} parent=1 // pred_check_branch
      %59 = sbr.rel (0) target = $region43
    $region42: #{tpu_custom_call.1} parent=1 // pred_region
      %60 = vsyncadd [#allocation3], 16
    $region43: #{tpu_custom_call.1} parent=1 // pred_fallthru
      _
    %s61 = sld [smem:[#allocation4 + $0x1]]
    %s62 = scalar_lea.vmem %s1, %s61
    %s63 = scalar_lea.vmem [#allocation2], 1
    %s64 = scalar_lea.sflag [#allocation3], 1
    // Predicated region
    $region44: #{tpu_custom_call.1} parent=1 // pred_check
      _
    $region45: #{tpu_custom_call.1} parent=1 // pred_check_branch
      %66 = sbr.rel target = $region47
    $region46: #{tpu_custom_call.1} parent=1 // pred_region
      // Predicated region
      $region59: #{tpu_custom_call.1} parent=46 // pred_check
        _
      $region60: #{tpu_custom_call.1} parent=46 // pred_check_branch
        %82 = sbr.rel (0) target = $region62
      $region61: #{tpu_custom_call.1} parent=46 // pred_region
        %s84 = ssub.s32 2, 1
        loop: start=0, step=1, limit=1
        $region63: #{tpu_custom_call.1} parent=61 // loop_pre_header
          _
        $region64: #{tpu_custom_call.1} parent=61 // loop_header
          %s86 = sphi 0, %s90
          %p87 = scmp.ge.s32.totalorder %s86, 1
          %s91 = sphi %s62, %s62
          %s92 = sphi %s63, %s63
        $region65: #{tpu_custom_call.1} parent=61 // loop_header_branch
          %89 = sbr.rel (%p87) target = $region69
        $region66: #{tpu_custom_call.1} parent=61 // loop_body
          %v93 = vld [vmem:[%s91] sm:%s84]
          %94 = vst [vmem:[%s92] sm:%s84] %v93
        $region67: #{tpu_custom_call.1} parent=61 // loop_footer
          %s90 = sadd.s32 1, %s86
        $region68: #{tpu_custom_call.1} parent=61 // loop_footer_branch
          %85 = sbr.rel target = $region64
        $region69: #{tpu_custom_call.1} parent=61 // loop_exit
          _
      $region62: #{tpu_custom_call.1} parent=46 // pred_fallthru
        _
    $region47: #{tpu_custom_call.1} parent=1 // pred_fallthru
      _
    // Predicated region
    $region48: #{tpu_custom_call.1} parent=1 // pred_check
      _
    $region49: #{tpu_custom_call.1} parent=1 // pred_check_branch
      %68 = sbr.rel (0) target = $region51
    $region50: #{tpu_custom_call.1} parent=1 // pred_region
      %s70 = ssub.s32 2, 1
      loop: start=0, step=1, limit=1
      $region52: #{tpu_custom_call.1} parent=50 // loop_pre_header
        _
      $region53: #{tpu_custom_call.1} parent=50 // loop_header
        %s72 = sphi 0, %s76
        %p73 = scmp.ge.s32.totalorder %s72, 1
        %s77 = sphi %s62, %s62
        %s78 = sphi %s63, %s63
      $region54: #{tpu_custom_call.1} parent=50 // loop_header_branch
        %75 = sbr.rel (%p73) target = $region58
      $region55: #{tpu_custom_call.1} parent=50 // loop_body
        %v79 = vld [vmem:[%s77] sm:%s70]
        %80 = vst [vmem:[%s78] sm:%s70] %v79
      $region56: #{tpu_custom_call.1} parent=50 // loop_footer
        %s76 = sadd.s32 1, %s72
      $region57: #{tpu_custom_call.1} parent=50 // loop_footer_branch
        %71 = sbr.rel target = $region53
      $region58: #{tpu_custom_call.1} parent=50 // loop_exit
        _
    $region51: #{tpu_custom_call.1} parent=1 // pred_fallthru
      _
    // Predicated region
    $region70: #{tpu_custom_call.1} parent=1 // pred_check
      _
    $region71: #{tpu_custom_call.1} parent=1 // pred_check_branch
      %97 = sbr.rel (0) target = $region73
    $region72: #{tpu_custom_call.1} parent=1 // pred_region
      %98 = vsyncadd %s64, 16
    $region73: #{tpu_custom_call.1} parent=1 // pred_fallthru
      _
    %s99 = sld [smem:[#allocation4 + $0x2]]
    %s100 = scalar_lea.vmem %s1, %s99
    %s101 = scalar_lea.vmem [#allocation2], 2
    %s102 = scalar_lea.sflag [#allocation3], 2
    // Predicated region
    $region74: #{tpu_custom_call.1} parent=1 // pred_check
      _
    $region75: #{tpu_custom_call.1} parent=1 // pred_check_branch
      %104 = sbr.rel target = $region77
    $region76: #{tpu_custom_call.1} parent=1 // pred_region
      // Predicated region
      $region89: #{tpu_custom_call.1} parent=76 // pred_check
        _
      $region90: #{tpu_custom_call.1} parent=76 // pred_check_branch
        %120 = sbr.rel (0) target = $region92
      $region91: #{tpu_custom_call.1} parent=76 // pred_region
        %s122 = ssub.s32 2, 1
        loop: start=0, step=1, limit=1
        $region93: #{tpu_custom_call.1} parent=91 // loop_pre_header
          _
        $region94: #{tpu_custom_call.1} parent=91 // loop_header
          %s124 = sphi 0, %s128
          %p125 = scmp.ge.s32.totalorder %s124, 1
          %s129 = sphi %s100, %s100
          %s130 = sphi %s101, %s101
        $region95: #{tpu_custom_call.1} parent=91 // loop_header_branch
          %127 = sbr.rel (%p125) target = $region99
        $region96: #{tpu_custom_call.1} parent=91 // loop_body
          %v131 = vld [vmem:[%s129] sm:%s122]
          %132 = vst [vmem:[%s130] sm:%s122] %v131
        $region97: #{tpu_custom_call.1} parent=91 // loop_footer
          %s128 = sadd.s32 1, %s124
        $region98: #{tpu_custom_call.1} parent=91 // loop_footer_branch
          %123 = sbr.rel target = $region94
        $region99: #{tpu_custom_call.1} parent=91 // loop_exit
          _
      $region92: #{tpu_custom_call.1} parent=76 // pred_fallthru
        _
    $region77: #{tpu_custom_call.1} parent=1 // pred_fallthru
      _
    // Predicated region
    $region78: #{tpu_custom_call.1} parent=1 // pred_check
      _
    $region79: #{tpu_custom_call.1} parent=1 // pred_check_branch
      %106 = sbr.rel (0) target = $region81
    $region80: #{tpu_custom_call.1} parent=1 // pred_region
      %s108 = ssub.s32 2, 1
      loop: start=0, step=1, limit=1
      $region82: #{tpu_custom_call.1} parent=80 // loop_pre_header
        _
      $region83: #{tpu_custom_call.1} parent=80 // loop_header
        %s110 = sphi 0, %s114
        %p111 = scmp.ge.s32.totalorder %s110, 1
        %s115 = sphi %s100, %s100
        %s116 = sphi %s101, %s101
      $region84: #{tpu_custom_call.1} parent=80 // loop_header_branch
        %113 = sbr.rel (%p111) target = $region88
      $region85: #{tpu_custom_call.1} parent=80 // loop_body
        %v117 = vld [vmem:[%s115] sm:%s108]
        %118 = vst [vmem:[%s116] sm:%s108] %v117
      $region86: #{tpu_custom_call.1} parent=80 // loop_footer
        %s114 = sadd.s32 1, %s110
      $region87: #{tpu_custom_call.1} parent=80 // loop_footer_branch
        %109 = sbr.rel target = $region83
      $region88: #{tpu_custom_call.1} parent=80 // loop_exit
        _
    $region81: #{tpu_custom_call.1} parent=1 // pred_fallthru
      _
    // Predicated region
    $region100: #{tpu_custom_call.1} parent=1 // pred_check
      _
    $region101: #{tpu_custom_call.1} parent=1 // pred_check_branch
      %135 = sbr.rel (0) target = $region103
    $region102: #{tpu_custom_call.1} parent=1 // pred_region
      %136 = vsyncadd %s102, 16
    $region103: #{tpu_custom_call.1} parent=1 // pred_fallthru
      _
    %s137 = sld [smem:[#allocation4 + $0x3]]
    %s138 = scalar_lea.vmem %s1, %s137
    %s139 = scalar_lea.vmem [#allocation2], 3
    %s140 = scalar_lea.sflag [#allocation3], 3
    // Predicated region
    $region104: #{tpu_custom_call.1} parent=1 // pred_check
      _
    $region105: #{tpu_custom_call.1} parent=1 // pred_check_branch
      %142 = sbr.rel target = $region107
    $region106: #{tpu_custom_call.1} parent=1 // pred_region
      // Predicated region
      $region119: #{tpu_custom_call.1} parent=106 // pred_check
        _
      $region120: #{tpu_custom_call.1} parent=106 // pred_check_branch
        %158 = sbr.rel (0) target = $region122
      $region121: #{tpu_custom_call.1} parent=106 // pred_region
        %s160 = ssub.s32 2, 1
        loop: start=0, step=1, limit=1
        $region123: #{tpu_custom_call.1} parent=121 // loop_pre_header
          _
        $region124: #{tpu_custom_call.1} parent=121 // loop_header
          %s162 = sphi 0, %s166
          %p163 = scmp.ge.s32.totalorder %s162, 1
          %s167 = sphi %s138, %s138
          %s168 = sphi %s139, %s139
        $region125: #{tpu_custom_call.1} parent=121 // loop_header_branch
          %165 = sbr.rel (%p163) target = $region129
        $region126: #{tpu_custom_call.1} parent=121 // loop_body
          %v169 = vld [vmem:[%s167] sm:%s160]
          %170 = vst [vmem:[%s168] sm:%s160] %v169
        $region127: #{tpu_custom_call.1} parent=121 // loop_footer
          %s166 = sadd.s32 1, %s162
        $region128: #{tpu_custom_call.1} parent=121 // loop_footer_branch
          %161 = sbr.rel target = $region124
        $region129: #{tpu_custom_call.1} parent=121 // loop_exit
          _
      $region122: #{tpu_custom_call.1} parent=106 // pred_fallthru
        _
    $region107: #{tpu_custom_call.1} parent=1 // pred_fallthru
      _
    // Predicated region
    $region108: #{tpu_custom_call.1} parent=1 // pred_check
      _
    $region109: #{tpu_custom_call.1} parent=1 // pred_check_branch
      %144 = sbr.rel (0) target = $region111
    $region110: #{tpu_custom_call.1} parent=1 // pred_region
      %s146 = ssub.s32 2, 1
      loop: start=0, step=1, limit=1
      $region112: #{tpu_custom_call.1} parent=110 // loop_pre_header
        _
      $region113: #{tpu_custom_call.1} parent=110 // loop_header
        %s148 = sphi 0, %s152
        %p149 = scmp.ge.s32.totalorder %s148, 1
        %s153 = sphi %s138, %s138
        %s154 = sphi %s139, %s139
      $region114: #{tpu_custom_call.1} parent=110 // loop_header_branch
        %151 = sbr.rel (%p149) target = $region118
      $region115: #{tpu_custom_call.1} parent=110 // loop_body
        %v155 = vld [vmem:[%s153] sm:%s146]
        %156 = vst [vmem:[%s154] sm:%s146] %v155
      $region116: #{tpu_custom_call.1} parent=110 // loop_footer
        %s152 = sadd.s32 1, %s148
      $region117: #{tpu_custom_call.1} parent=110 // loop_footer_branch
        %147 = sbr.rel target = $region113
      $region118: #{tpu_custom_call.1} parent=110 // loop_exit
        _
    $region111: #{tpu_custom_call.1} parent=1 // pred_fallthru
      _
    // Predicated region
    $region130: #{tpu_custom_call.1} parent=1 // pred_check
      _
    $region131: #{tpu_custom_call.1} parent=1 // pred_check_branch
      %173 = sbr.rel (0) target = $region133
    $region132: #{tpu_custom_call.1} parent=1 // pred_region
      %174 = vsyncadd %s140, 16
    $region133: #{tpu_custom_call.1} parent=1 // pred_fallthru
      _
    %s175 = sld [smem:[#allocation4 + $0x4]]
    %s176 = scalar_lea.vmem %s1, %s175
    %s177 = scalar_lea.vmem [#allocation2], 4
    %s178 = scalar_lea.sflag [#allocation3], 4
    // Predicated region
    $region134: #{tpu_custom_call.1} parent=1 // pred_check
      _
    $region135: #{tpu_custom_call.1} parent=1 // pred_check_branch
      %180 = sbr.rel target = $region137
    $region136: #{tpu_custom_call.1} parent=1 // pred_region
      // Predicated region
      $region149: #{tpu_custom_call.1} parent=136 // pred_check
        _
      $region150: #{tpu_custom_call.1} parent=136 // pred_check_branch
        %196 = sbr.rel (0) target = $region152
      $region151: #{tpu_custom_call.1} parent=136 // pred_region
        %s198 = ssub.s32 2, 1
        loop: start=0, step=1, limit=1
        $region153: #{tpu_custom_call.1} parent=151 // loop_pre_header
          _
        $region154: #{tpu_custom_call.1} parent=151 // loop_header
          %s200 = sphi 0, %s204
          %p201 = scmp.ge.s32.totalorder %s200, 1
          %s205 = sphi %s176, %s176
          %s206 = sphi %s177, %s177
        $region155: #{tpu_custom_call.1} parent=151 // loop_header_branch
          %203 = sbr.rel (%p201) target = $region159
        $region156: #{tpu_custom_call.1} parent=151 // loop_body
          %v207 = vld [vmem:[%s205] sm:%s198]
          %208 = vst [vmem:[%s206] sm:%s198] %v207
        $region157: #{tpu_custom_call.1} parent=151 // loop_footer
          %s204 = sadd.s32 1, %s200
        $region158: #{tpu_custom_call.1} parent=151 // loop_footer_branch
          %199 = sbr.rel target = $region154
        $region159: #{tpu_custom_call.1} parent=151 // loop_exit
          _
      $region152: #{tpu_custom_call.1} parent=136 // pred_fallthru
        _
    $region137: #{tpu_custom_call.1} parent=1 // pred_fallthru
      _
    // Predicated region
    $region138: #{tpu_custom_call.1} parent=1 // pred_check
      _
    $region139: #{tpu_custom_call.1} parent=1 // pred_check_branch
      %182 = sbr.rel (0) target = $region141
    $region140: #{tpu_custom_call.1} parent=1 // pred_region
      %s184 = ssub.s32 2, 1
      loop: start=0, step=1, limit=1
      $region142: #{tpu_custom_call.1} parent=140 // loop_pre_header
        _
      $region143: #{tpu_custom_call.1} parent=140 // loop_header
        %s186 = sphi 0, %s190
        %p187 = scmp.ge.s32.totalorder %s186, 1
        %s191 = sphi %s176, %s176
        %s192 = sphi %s177, %s177
      $region144: #{tpu_custom_call.1} parent=140 // loop_header_branch
        %189 = sbr.rel (%p187) target = $region148
      $region145: #{tpu_custom_call.1} parent=140 // loop_body
        %v193 = vld [vmem:[%s191] sm:%s184]
        %194 = vst [vmem:[%s192] sm:%s184] %v193
      $region146: #{tpu_custom_call.1} parent=140 // loop_footer
        %s190 = sadd.s32 1, %s186
      $region147: #{tpu_custom_call.1} parent=140 // loop_footer_branch
        %185 = sbr.rel target = $region143
      $region148: #{tpu_custom_call.1} parent=140 // loop_exit
        _
    $region141: #{tpu_custom_call.1} parent=1 // pred_fallthru
      _
    // Predicated region
    $region160: #{tpu_custom_call.1} parent=1 // pred_check
      _
    $region161: #{tpu_custom_call.1} parent=1 // pred_check_branch
      %211 = sbr.rel (0) target = $region163
    $region162: #{tpu_custom_call.1} parent=1 // pred_region
      %212 = vsyncadd %s178, 16
    $region163: #{tpu_custom_call.1} parent=1 // pred_fallthru
      _
    %s213 = sld [smem:[#allocation4 + $0x5]]
    %s214 = scalar_lea.vmem %s1, %s213
    %s215 = scalar_lea.vmem [#allocation2], 5
    %s216 = scalar_lea.sflag [#allocation3], 5
    // Predicated region
    $region164: #{tpu_custom_call.1} parent=1 // pred_check
      _
    $region165: #{tpu_custom_call.1} parent=1 // pred_check_branch
      %218 = sbr.rel target = $region167
    $region166: #{tpu_custom_call.1} parent=1 // pred_region
      // Predicated region
      $region179: #{tpu_custom_call.1} parent=166 // pred_check
        _
      $region180: #{tpu_custom_call.1} parent=166 // pred_check_branch
        %234 = sbr.rel (0) target = $region182
      $region181: #{tpu_custom_call.1} parent=166 // pred_region
        %s236 = ssub.s32 2, 1
        loop: start=0, step=1, limit=1
        $region183: #{tpu_custom_call.1} parent=181 // loop_pre_header
          _
        $region184: #{tpu_custom_call.1} parent=181 // loop_header
          %s238 = sphi 0, %s242
          %p239 = scmp.ge.s32.totalorder %s238, 1
          %s243 = sphi %s214, %s214
          %s244 = sphi %s215, %s215
        $region185: #{tpu_custom_call.1} parent=181 // loop_header_branch
          %241 = sbr.rel (%p239) target = $region189
        $region186: #{tpu_custom_call.1} parent=181 // loop_body
          %v245 = vld [vmem:[%s243] sm:%s236]
          %246 = vst [vmem:[%s244] sm:%s236] %v245
        $region187: #{tpu_custom_call.1} parent=181 // loop_footer
          %s242 = sadd.s32 1, %s238
        $region188: #{tpu_custom_call.1} parent=181 // loop_footer_branch
          %237 = sbr.rel target = $region184
        $region189: #{tpu_custom_call.1} parent=181 // loop_exit
          _
      $region182: #{tpu_custom_call.1} parent=166 // pred_fallthru
        _
    $region167: #{tpu_custom_call.1} parent=1 // pred_fallthru
      _
    // Predicated region
    $region168: #{tpu_custom_call.1} parent=1 // pred_check
      _
    $region169: #{tpu_custom_call.1} parent=1 // pred_check_branch
      %220 = sbr.rel (0) target = $region171
    $region170: #{tpu_custom_call.1} parent=1 // pred_region
      %s222 = ssub.s32 2, 1
      loop: start=0, step=1, limit=1
      $region172: #{tpu_custom_call.1} parent=170 // loop_pre_header
        _
      $region173: #{tpu_custom_call.1} parent=170 // loop_header
        %s224 = sphi 0, %s228
        %p225 = scmp.ge.s32.totalorder %s224, 1
        %s229 = sphi %s214, %s214
        %s230 = sphi %s215, %s215
      $region174: #{tpu_custom_call.1} parent=170 // loop_header_branch
        %227 = sbr.rel (%p225) target = $region178
      $region175: #{tpu_custom_call.1} parent=170 // loop_body
        %v231 = vld [vmem:[%s229] sm:%s222]
        %232 = vst [vmem:[%s230] sm:%s222] %v231
      $region176: #{tpu_custom_call.1} parent=170 // loop_footer
        %s228 = sadd.s32 1, %s224
      $region177: #{tpu_custom_call.1} parent=170 // loop_footer_branch
        %223 = sbr.rel target = $region173
      $region178: #{tpu_custom_call.1} parent=170 // loop_exit
        _
    $region171: #{tpu_custom_call.1} parent=1 // pred_fallthru
      _
    // Predicated region
    $region190: #{tpu_custom_call.1} parent=1 // pred_check
      _
    $region191: #{tpu_custom_call.1} parent=1 // pred_check_branch
      %249 = sbr.rel (0) target = $region193
    $region192: #{tpu_custom_call.1} parent=1 // pred_region
      %250 = vsyncadd %s216, 16
    $region193: #{tpu_custom_call.1} parent=1 // pred_fallthru
      _
    %s251 = sld [smem:[#allocation4 + $0x6]]
    %s252 = scalar_lea.vmem %s1, %s251
    %s253 = scalar_lea.vmem [#allocation2], 6
    %s254 = scalar_lea.sflag [#allocation3], 6
    // Predicated region
    $region194: #{tpu_custom_call.1} parent=1 // pred_check
      _
    $region195: #{tpu_custom_call.1} parent=1 // pred_check_branch
      %256 = sbr.rel target = $region197
    $region196: #{tpu_custom_call.1} parent=1 // pred_region
      // Predicated region
      $region209: #{tpu_custom_call.1} parent=196 // pred_check
        _
      $region210: #{tpu_custom_call.1} parent=196 // pred_check_branch
        %272 = sbr.rel (0) target = $region212
      $region211: #{tpu_custom_call.1} parent=196 // pred_region
        %s274 = ssub.s32 2, 1
        loop: start=0, step=1, limit=1
        $region213: #{tpu_custom_call.1} parent=211 // loop_pre_header
          _
        $region214: #{tpu_custom_call.1} parent=211 // loop_header
          %s276 = sphi 0, %s280
          %p277 = scmp.ge.s32.totalorder %s276, 1
          %s281 = sphi %s252, %s252
          %s282 = sphi %s253, %s253
        $region215: #{tpu_custom_call.1} parent=211 // loop_header_branch
          %279 = sbr.rel (%p277) target = $region219
        $region216: #{tpu_custom_call.1} parent=211 // loop_body
          %v283 = vld [vmem:[%s281] sm:%s274]
          %284 = vst [vmem:[%s282] sm:%s274] %v283
        $region217: #{tpu_custom_call.1} parent=211 // loop_footer
          %s280 = sadd.s32 1, %s276
        $region218: #{tpu_custom_call.1} parent=211 // loop_footer_branch
          %275 = sbr.rel target = $region214
        $region219: #{tpu_custom_call.1} parent=211 // loop_exit
          _
      $region212: #{tpu_custom_call.1} parent=196 // pred_fallthru
        _
    $region197: #{tpu_custom_call.1} parent=1 // pred_fallthru
      _
    // Predicated region
    $region198: #{tpu_custom_call.1} parent=1 // pred_check
      _
    $region199: #{tpu_custom_call.1} parent=1 // pred_check_branch
      %258 = sbr.rel (0) target = $region201
    $region200: #{tpu_custom_call.1} parent=1 // pred_region
      %s260 = ssub.s32 2, 1
      loop: start=0, step=1, limit=1
      $region202: #{tpu_custom_call.1} parent=200 // loop_pre_header
        _
      $region203: #{tpu_custom_call.1} parent=200 // loop_header
        %s262 = sphi 0, %s266
        %p263 = scmp.ge.s32.totalorder %s262, 1
        %s267 = sphi %s252, %s252
        %s268 = sphi %s253, %s253
      $region204: #{tpu_custom_call.1} parent=200 // loop_header_branch
        %265 = sbr.rel (%p263) target = $region208
      $region205: #{tpu_custom_call.1} parent=200 // loop_body
        %v269 = vld [vmem:[%s267] sm:%s260]
        %270 = vst [vmem:[%s268] sm:%s260] %v269
      $region206: #{tpu_custom_call.1} parent=200 // loop_footer
        %s266 = sadd.s32 1, %s262
      $region207: #{tpu_custom_call.1} parent=200 // loop_footer_branch
        %261 = sbr.rel target = $region203
      $region208: #{tpu_custom_call.1} parent=200 // loop_exit
        _
    $region201: #{tpu_custom_call.1} parent=1 // pred_fallthru
      _
    // Predicated region
    $region220: #{tpu_custom_call.1} parent=1 // pred_check
      _
    $region221: #{tpu_custom_call.1} parent=1 // pred_check_branch
      %287 = sbr.rel (0) target = $region223
    $region222: #{tpu_custom_call.1} parent=1 // pred_region
      %288 = vsyncadd %s254, 16
    $region223: #{tpu_custom_call.1} parent=1 // pred_fallthru
      _
    %s289 = sld [smem:[#allocation4 + $0x7]]
    %s290 = scalar_lea.vmem %s1, %s289
    %s291 = scalar_lea.vmem [#allocation2], 7
    %s292 = scalar_lea.sflag [#allocation3], 7
    // Predicated region
    $region224: #{tpu_custom_call.1} parent=1 // pred_check
      _
    $region225: #{tpu_custom_call.1} parent=1 // pred_check_branch
      %294 = sbr.rel target = $region227
    $region226: #{tpu_custom_call.1} parent=1 // pred_region
      // Predicated region
      $region239: #{tpu_custom_call.1} parent=226 // pred_check
        _
      $region240: #{tpu_custom_call.1} parent=226 // pred_check_branch
        %310 = sbr.rel (0) target = $region242
      $region241: #{tpu_custom_call.1} parent=226 // pred_region
        %s312 = ssub.s32 2, 1
        loop: start=0, step=1, limit=1
        $region243: #{tpu_custom_call.1} parent=241 // loop_pre_header
          _
        $region244: #{tpu_custom_call.1} parent=241 // loop_header
          %s314 = sphi 0, %s318
          %p315 = scmp.ge.s32.totalorder %s314, 1
          %s319 = sphi %s290, %s290
          %s320 = sphi %s291, %s291
        $region245: #{tpu_custom_call.1} parent=241 // loop_header_branch
          %317 = sbr.rel (%p315) target = $region249
        $region246: #{tpu_custom_call.1} parent=241 // loop_body
          %v321 = vld [vmem:[%s319] sm:%s312]
          %322 = vst [vmem:[%s320] sm:%s312] %v321
        $region247: #{tpu_custom_call.1} parent=241 // loop_footer
          %s318 = sadd.s32 1, %s314
        $region248: #{tpu_custom_call.1} parent=241 // loop_footer_branch
          %313 = sbr.rel target = $region244
        $region249: #{tpu_custom_call.1} parent=241 // loop_exit
          _
      $region242: #{tpu_custom_call.1} parent=226 // pred_fallthru
        _
    $region227: #{tpu_custom_call.1} parent=1 // pred_fallthru
      _
    // Predicated region
    $region228: #{tpu_custom_call.1} parent=1 // pred_check
      _
    $region229: #{tpu_custom_call.1} parent=1 // pred_check_branch
      %296 = sbr.rel (0) target = $region231
    $region230: #{tpu_custom_call.1} parent=1 // pred_region
      %s298 = ssub.s32 2, 1
      loop: start=0, step=1, limit=1
      $region232: #{tpu_custom_call.1} parent=230 // loop_pre_header
        _
      $region233: #{tpu_custom_call.1} parent=230 // loop_header
        %s300 = sphi 0, %s304
        %p301 = scmp.ge.s32.totalorder %s300, 1
        %s305 = sphi %s290, %s290
        %s306 = sphi %s291, %s291
      $region234: #{tpu_custom_call.1} parent=230 // loop_header_branch
        %303 = sbr.rel (%p301) target = $region238
      $region235: #{tpu_custom_call.1} parent=230 // loop_body
        %v307 = vld [vmem:[%s305] sm:%s298]
        %308 = vst [vmem:[%s306] sm:%s298] %v307
      $region236: #{tpu_custom_call.1} parent=230 // loop_footer
        %s304 = sadd.s32 1, %s300
      $region237: #{tpu_custom_call.1} parent=230 // loop_footer_branch
        %299 = sbr.rel target = $region233
      $region238: #{tpu_custom_call.1} parent=230 // loop_exit
        _
    $region231: #{tpu_custom_call.1} parent=1 // pred_fallthru
      _
    // Predicated region
    $region250: #{tpu_custom_call.1} parent=1 // pred_check
      _
    $region251: #{tpu_custom_call.1} parent=1 // pred_check_branch
      %325 = sbr.rel (0) target = $region253
    $region252: #{tpu_custom_call.1} parent=1 // pred_region
      %326 = vsyncadd %s292, 16
    $region253: #{tpu_custom_call.1} parent=1 // pred_fallthru
      _
    %s327 = smul.u32 1, 1
    %s328 = sshll.u32 %s327, 4
    %329 = dma.done [#allocation3], %s328
    %s330 = sshll.u32 %s327, 4
    %331 = dma.done %s64, %s330
    %s332 = sshll.u32 %s327, 4
    %333 = dma.done %s102, %s332
    %s334 = sshll.u32 %s327, 4
    %335 = dma.done %s140, %s334
    %s336 = sshll.u32 %s327, 4
    %337 = dma.done %s178, %s336
    %s338 = sshll.u32 %s327, 4
    %339 = dma.done %s216, %s338
    %s340 = sshll.u32 %s327, 4
    %341 = dma.done %s254, %s340
    %s342 = sshll.u32 %s327, 4
    %343 = dma.done %s292, %s342
    %v344 = vld [vmem:[%s2] sm:$0xff]
    %v345 = vld [vmem:[%s2 + $0x8] sm:$0xff]
    %v346 = vld [vmem:[%s2 + $0x10] sm:$0xff]
    %v347 = vld [vmem:[%s2 + $0x18] sm:$0xff]
    %v348 = vld [vmem:[%s2 + $0x20] sm:$0xff]
    %v349 = vld [vmem:[%s2 + $0x28] sm:$0xff]
    %v350 = vld [vmem:[%s2 + $0x30] sm:$0xff]
    %v351 = vld [vmem:[%s2 + $0x38] sm:$0xff]
    %v352 = vld [vmem:[%s2 + $0x40] sm:$0xff]
    %v353 = vld [vmem:[#allocation2] sm:$0xff]
    %v354 = vmax.f32 %v353, 0.0
    %v355 = vperm.slane %v352, 0
    %vm356 = vcmask 523264
    %v358 = vsel %vm356, %v354, 0
    %360 = vmatpush.msra.mxu0 0.0
    %361 = vmatpush.msra.mxu0 0.0
    %362 = vmatpush.msra.mxu0 0.0
    %363 = vmatpush.msra.mxu0 0.0
    %364 = vmatpush.msra.mxu0 0.0
    %365 = vmatpush.msra.mxu0 0.0
    %366 = vmatpush.msra.mxu0 0.0
    %367 = vmatpush.msra.mxu0 0.0
    %368 = vmatpush.msra.mxu0 %v351
    %369 = vmatpush.msra.mxu0 %v350
    %370 = vmatpush.msra.mxu0 %v349
    %371 = vmatpush.msra.mxu0 %v348
    %372 = vmatpush.msra.mxu0 %v347
    %373 = vmatpush.msra.mxu0 %v346
    %374 = vmatpush.msra.mxu0 %v345
    %375 = vmatpush.msra.mxu0 %v344
    %376 = vmatmul.f32.gmra.mxu0 %v358
    %v377 = vpop.f32.mrf.mxu0
    %v378 = vadd.f32 %v355, %v377
    %379 = vdwg.mxu0
    %v380 = vmax.f32 %v378, 0.0
    %v381 = vperm.slane %v352, 1
    %v382 = vmul.f32 %v380, %v381
    %v383 = vsel %vm356, %v382, 0.0
    %384 = vadd.xlane.f32.xlu0 %v383
    %v385 = vpop.xlane.xlu0 %384
    %v386 = vperm.slane %v352, 2
    %v387 = vadd.f32 %v385, %v386
    %vm388 = vcmask 7168
    %389 = vst.msk [vmem:[%s3] sm:$0xff] %vm388, %v387
    // Predicated region
    $region254: #{tpu_custom_call.1} parent=1 // pred_check
      _
    $region255: #{tpu_custom_call.1} parent=1 // pred_check_branch
      %391 = sbr.rel (0) target = $region257
    $region256: #{tpu_custom_call.1} parent=1 // pred_region
      _
    $region257: #{tpu_custom_call.1} parent=1 // pred_fallthru
      _
    // Predicated region
    $region258: #{tpu_custom_call.1} parent=1 // pred_check
      _
    $region259: #{tpu_custom_call.1} parent=1 // pred_check_branch
      %393 = sbr.rel (0) target = $region261
    $region260: #{tpu_custom_call.1} parent=1 // pred_region
      _
    $region261: #{tpu_custom_call.1} parent=1 // pred_fallthru
      _
    %394 = vsyncpa [#allocation5], 1
  %395 = vsyncmov [#allocation3]
  %s396 = vpop.sfrf %395
  %p397 = scmp.eq.s32.totalorder %s396, 0
  %p398 = pneg %p397
  %400 = shalt.err (%p398)
  %s401 = scalar_lea.sflag [#allocation3], 1
  %402 = vsyncmov %s401
  %s403 = vpop.sfrf %402
  %p404 = scmp.eq.s32.totalorder %s403, 0
  %p405 = pneg %p404
  %407 = shalt.err (%p405)
  %s408 = scalar_lea.sflag [#allocation3], 2
  %409 = vsyncmov %s408
  %s410 = vpop.sfrf %409
  %p411 = scmp.eq.s32.totalorder %s410, 0
  %p412 = pneg %p411
  %414 = shalt.err (%p412)
  %s415 = scalar_lea.sflag [#allocation3], 3
  %416 = vsyncmov %s415
  %s417 = vpop.sfrf %416
  %p418 = scmp.eq.s32.totalorder %s417, 0
  %p419 = pneg %p418
  %421 = shalt.err (%p419)
  %s422 = scalar_lea.sflag [#allocation3], 4
  %423 = vsyncmov %s422
  %s424 = vpop.sfrf %423
  %p425 = scmp.eq.s32.totalorder %s424, 0
  %p426 = pneg %p425
  %428 = shalt.err (%p426)
  %s429 = scalar_lea.sflag [#allocation3], 5
  %430 = vsyncmov %s429
  %s431 = vpop.sfrf %430
  %p432 = scmp.eq.s32.totalorder %s431, 0
  %p433 = pneg %p432
  %435 = shalt.err (%p433)
  %s436 = scalar_lea.sflag [#allocation3], 6
  %437 = vsyncmov %s436
  %s438 = vpop.sfrf %437
  %p439 = scmp.eq.s32.totalorder %s438, 0
  %p440 = pneg %p439
  %442 = shalt.err (%p440)
  %s443 = scalar_lea.sflag [#allocation3], 7
  %444 = vsyncmov %s443
  %s445 = vpop.sfrf %444
  %p446 = scmp.eq.s32.totalorder %s445, 0
  %p447 = pneg %p446
  %449 = shalt.err (%p447)

</llo_original>
